<compile_context>
chip_gen: v5e
topology: v5e:2x2
jax: 0.10.0
libtpu: 0.0.40
codegen_flags: <defaults>
</compile_context>

<pallas_src>
import jax
import jax.numpy as jnp
from jax.experimental import pallas as pl
from jax.experimental.pallas import tpu as pltpu


def mlp_kernel(x_ref, w1t_ref, b1_ref, w2t_ref, b2_ref, o_ref):
    """One token-tile of: out = x + Linear2(ReLU(Linear1(x))).

    Natural layout (tokens on the sublane axis, features on lanes):
      x_ref:   [TM, F_in]
      w1t_ref: [F_in, H]     b1_ref: [1, H]      (f32 bias)
      w2t_ref: [H, F_out]    b2_ref: [1, F_out]  (f32 bias)
      o_ref:   [TM, F_out]
    """
    x = x_ref[...]  # native dtype feeds the MXU directly (bf16 stays bf16)

    # Layer 1 (+ ReLU), accumulated in f32 on the MXU.
    h = jnp.dot(x, w1t_ref[...], preferred_element_type=jnp.float32)
    h = jnp.maximum(h + b1_ref[...], 0.0)

    # TODO(synk): nn.Dropout(p=0.0) is an identity in eval / with p=0; omitted.

    # Layer 2, no activation (last_act=False).  Cast h back to the weight
    # dtype so bf16 weights keep bf16 MXU traffic (no-op for f32 weights).
    out = jnp.dot(h.astype(w2t_ref.dtype), w2t_ref[...],
                  preferred_element_type=jnp.float32)
    out = out + b2_ref[...]

    # Residual shortcut (in_features == out_features); single store per tile.
    o_ref[...] = (x.astype(jnp.float32) + out).astype(o_ref.dtype)


def _round_up(x, m):
    return ((x + m - 1) // m) * m


def mlp_forward(x, w1, b1, w2, b2):
    """x: [..., F_in].  Weights in PyTorch-native layout:
       w1: [H, F_in], b1: [H], w2: [F_out, H], b2: [F_out]."""
    orig_shape = x.shape
    f_in = orig_shape[-1]
    hidden = w1.shape[0]
    f_out = w2.shape[0]
    assert f_in == f_out, "shortcut requires in_features == out_features"

    # Natural [tokens, F] layout — collapsing leading dims is metadata-only;
    # no transpose / pad of the (potentially large) activation tensor.
    x2d = x.reshape(-1, f_in)
    tokens = x2d.shape[0]

    # Transpose only the tiny weights so the kernel contracts on x's last dim.
    w1t = w1.T                                   # [F_in, H]
    w2t = w2.T                                   # [H, F_out]
    b1r = b1.reshape(1, hidden).astype(jnp.float32)
    b2r = b2.reshape(1, f_out).astype(jnp.float32)

    # --- Token-tile sizing (VMEM budget includes the f32 intermediates) -----
    itemsize = jnp.dtype(x.dtype).itemsize
    per_token_bytes = (2 * 2 * (f_in + f_out) * itemsize   # x & out tiles, double-buffered
                       + (hidden + 2 * f_out) * 4)         # f32 h + f32 out/residual scratch
    budget = 24 << 20                                      # safe even on v7x (64 MiB VMEM)
    TM = min(16384, max(512, ((budget // per_token_bytes) // 512) * 512))
    # Don't over-pad tiny inputs: clamp to the sublane-rounded token count.
    TM = min(TM, max(8, _round_up(tokens, 8)))
    # Keep >= ~4 grid steps for large inputs so the "parallel" token axis can
    # split across v7x's two TensorCores (shrink TM instead of a 1-step grid).
    if tokens > 4 * 1024:
        TM = min(TM, max(512, _round_up(pl.cdiv(tokens, 4), 512)))

    grid = (pl.cdiv(tokens, TM),)   # Pallas masks the ragged last block

    weight_bytes = ((w1t.size + w2t.size) * jnp.dtype(w1.dtype).itemsize
                    + (hidden + f_out) * 4)
    vmem_limit = min(int(TM * per_token_bytes + 2 * weight_bytes) + (8 << 20),
                     48 << 20)      # stay under v7x's 64 MiB physical VMEM

    out2d = pl.pallas_call(
        mlp_kernel,
        out_shape=jax.ShapeDtypeStruct((tokens, f_out), x.dtype),
        grid_spec=pltpu.PrefetchScalarGridSpec(
            num_scalar_prefetch=0,
            grid=grid,
            in_specs=[
                pl.BlockSpec((TM, f_in), lambda i: (i, 0)),   # x tile, streamed
                pl.BlockSpec(w1t.shape, lambda i: (0, 0)),    # weights resident
                pl.BlockSpec(b1r.shape, lambda i: (0, 0)),
                pl.BlockSpec(w2t.shape, lambda i: (0, 0)),
                pl.BlockSpec(b2r.shape, lambda i: (0, 0)),
            ],
            out_specs=pl.BlockSpec((TM, f_out), lambda i: (i, 0)),
        ),
        compiler_params=pltpu.CompilerParams(
            dimension_semantics=("parallel",),   # shards tokens across TCs (v7x)
            vmem_limit_bytes=vmem_limit),
    )(x2d, w1t, b1r, w2t, b2r)

    return out2d.reshape(orig_shape[:-1] + (f_out,))


def init_params(key, in_features, hidden_features, out_features):
    """Mimics trunc_normal_(w, std=0.01) and zero bias from _reset_parameters.
    Weights stay in PyTorch-native [out, in] layout (wrapper transposes them)."""
    k1, k2 = jax.random.split(key)
    w1 = (jax.random.truncated_normal(k1, -2.0, 2.0,
                                      (hidden_features, in_features),
                                      jnp.float32) * 0.01)
    w2 = (jax.random.truncated_normal(k2, -2.0, 2.0,
                                      (out_features, hidden_features),
                                      jnp.float32) * 0.01)
    b1 = jnp.zeros((hidden_features,), jnp.float32)
    b2 = jnp.zeros((out_features,), jnp.float32)
    return w1, b1, w2, b2


if __name__ == "__main__":
    batch, seq = 2, 8
    in_features, hidden, out_features = 32, 64, 32  # shortcut active (in == out)

    key = jax.random.PRNGKey(0)
    kx, kp = jax.random.split(key)
    x = jax.random.normal(kx, (batch, seq, in_features), jnp.float32)
    w1, b1, w2, b2 = init_params(kp, in_features, hidden, out_features)

    out = mlp_forward(x, w1, b1, w2, b2)
    jax.block_until_ready(out)

    # Pure-JAX reference check (same math as the PyTorch module).
    h_ref = jnp.maximum(x @ w1.T + b1, 0.0)
    ref = x + (h_ref @ w2.T + b2)
    assert out.shape == (batch, seq, out_features)
    assert jnp.allclose(out, ref, atol=1e-5, rtol=1e-5)

    print("KERNEL_OK")
</pallas_src>

<mosaic_0001>
module attributes {stable_mosaic.version = 11 : i64} {
  func.func @mlp_kernel(%arg0: i32, %arg1: memref<16x32xf32, #tpu.memory_space<vmem>>, %arg2: memref<32x64xf32, #tpu.memory_space<vmem>>, %arg3: memref<1x64xf32, #tpu.memory_space<vmem>>, %arg4: memref<64x32xf32, #tpu.memory_space<vmem>>, %arg5: memref<1x32xf32, #tpu.memory_space<vmem>>, %arg6: memref<16x32xf32, #tpu.memory_space<vmem>>) attributes {dimension_semantics = [#tpu.dimension_semantics<parallel>], iteration_bounds = array<i64: 1>, scalar_prefetch = 0 : i64, scratch_operands = 0 : i64, tpu.core_type = #tpu.core_type<tc>, window_params = [{transform_indices = @transform_0, window_bounds = array<i64: 16, 32>}, {pipeline_mode = #tpu.pipeline_mode<synchronous>, transform_indices = @transform_1, window_bounds = array<i64: 32, 64>}, {pipeline_mode = #tpu.pipeline_mode<synchronous>, transform_indices = @transform_2, window_bounds = array<i64: 1, 64>}, {pipeline_mode = #tpu.pipeline_mode<synchronous>, transform_indices = @transform_3, window_bounds = array<i64: 64, 32>}, {pipeline_mode = #tpu.pipeline_mode<synchronous>, transform_indices = @transform_4, window_bounds = array<i64: 1, 32>}, {transform_indices = @transform_5, window_bounds = array<i64: 16, 32>}]} {
    %c0 = arith.constant 0 : index
    %c0_0 = arith.constant 0 : index
    %0 = vector.load %arg1[%c0, %c0_0] : memref<16x32xf32, #tpu.memory_space<vmem>>, vector<16x32xf32>
    %c0_1 = arith.constant 0 : index
    %c0_2 = arith.constant 0 : index
    %1 = vector.load %arg2[%c0_1, %c0_2] : memref<32x64xf32, #tpu.memory_space<vmem>>, vector<32x64xf32>
    %cst = arith.constant dense<0.000000e+00> : vector<16x64xf32>
    %2 = tpu.matmul %0, %1, %cst {dimension_numbers = #tpu.dot_dimension_numbers<[1], [0], [0], [1], [0, 0, 1, 1], [], []>} : vector<16x32xf32>, vector<32x64xf32>, vector<16x64xf32> -> vector<16x64xf32>
    %c0_3 = arith.constant 0 : index
    %c0_4 = arith.constant 0 : index
    %3 = vector.load %arg3[%c0_3, %c0_4] : memref<1x64xf32, #tpu.memory_space<vmem>>, vector<1x64xf32>
    %4 = vector.broadcast %3 : vector<1x64xf32> to vector<16x64xf32>
    %5 = arith.addf %2, %4 : vector<16x64xf32>
    %cst_5 = arith.constant 0.000000e+00 : f32
    %6 = vector.broadcast %cst_5 : f32 to vector<16x64xf32>
    %7 = arith.maximumf %5, %6 : vector<16x64xf32>
    %c0_6 = arith.constant 0 : index
    %c0_7 = arith.constant 0 : index
    %8 = vector.load %arg4[%c0_6, %c0_7] : memref<64x32xf32, #tpu.memory_space<vmem>>, vector<64x32xf32>
    %cst_8 = arith.constant dense<0.000000e+00> : vector<16x32xf32>
    %9 = tpu.matmul %7, %8, %cst_8 {dimension_numbers = #tpu.dot_dimension_numbers<[1], [0], [0], [1], [0, 0, 1, 1], [], []>} : vector<16x64xf32>, vector<64x32xf32>, vector<16x32xf32> -> vector<16x32xf32>
    %c0_9 = arith.constant 0 : index
    %c0_10 = arith.constant 0 : index
    %10 = vector.load %arg5[%c0_9, %c0_10] : memref<1x32xf32, #tpu.memory_space<vmem>>, vector<1x32xf32>
    %11 = vector.broadcast %10 : vector<1x32xf32> to vector<16x32xf32>
    %12 = arith.addf %9, %11 : vector<16x32xf32>
    %13 = arith.addf %0, %12 : vector<16x32xf32>
    %c0_11 = arith.constant 0 : index
    %c0_12 = arith.constant 0 : index
    %14 = vector.load %arg6[%c0_11, %c0_12] : memref<16x32xf32, #tpu.memory_space<vmem>>, vector<16x32xf32>
    tpu.vector_store %arg6[%c0_11, %c0_12], %13 {strides = array<i32>} : memref<16x32xf32, #tpu.memory_space<vmem>>, vector<16x32xf32>,
    return
  }
  func.func @transform_0(%arg0: i32) -> (i32, i32) {
    %c0_i32 = arith.constant 0 : i32
    %c0_i32_0 = arith.constant 0 : i32
    return %arg0, %c0_i32 : i32, i32
  }
  func.func @transform_1(%arg0: i32) -> (i32, i32) {
    %c0_i32 = arith.constant 0 : i32
    %c0_i32_0 = arith.constant 0 : i32
    %c0_i32_1 = arith.constant 0 : i32
    return %c0_i32, %c0_i32_0 : i32, i32
  }
  func.func @transform_2(%arg0: i32) -> (i32, i32) {
    %c0_i32 = arith.constant 0 : i32
    %c0_i32_0 = arith.constant 0 : i32
    %c0_i32_1 = arith.constant 0 : i32
    return %c0_i32, %c0_i32_0 : i32, i32
  }
  func.func @transform_3(%arg0: i32) -> (i32, i32) {
    %c0_i32 = arith.constant 0 : i32
    %c0_i32_0 = arith.constant 0 : i32
    %c0_i32_1 = arith.constant 0 : i32
    return %c0_i32, %c0_i32_0 : i32, i32
  }
  func.func @transform_4(%arg0: i32) -> (i32, i32) {
    %c0_i32 = arith.constant 0 : i32
    %c0_i32_0 = arith.constant 0 : i32
    %c0_i32_1 = arith.constant 0 : i32
    return %c0_i32, %c0_i32_0 : i32, i32
  }
  func.func @transform_5(%arg0: i32) -> (i32, i32) {
    %c0_i32 = arith.constant 0 : i32
    %c0_i32_0 = arith.constant 0 : i32
    return %arg0, %c0_i32 : i32, i32
  }
}

</mosaic_0001>

<llo_original>
// kernel: tpu_custom_call.1
$region0: #{tpu_custom_call.1}
  #allocation0 [shape = 'u32[]', space=smem, size = 0x4, offset = 0x4, fixed_abs, tag = 'smem constant byte address 0x4 - core index']
  #allocation1 [shape = 'u32[72,128]{1,0:T(1,128)}', space=vmem, size = 0x9000, scoped, tag = 'internal scratch']
  %s0 = inlined_call_operand.vmem [shape: f32[16,32], index: 0, kind: input, shape index: {}]
  %s1 = inlined_call_operand.vmem [shape: f32[32,64], index: 1, kind: input, shape index: {}]
  %s2 = inlined_call_operand.vmem [shape: f32[1,64], index: 2, kind: input, shape index: {}]
  %s3 = inlined_call_operand.vmem [shape: f32[64,32], index: 3, kind: input, shape index: {}]
  %s4 = inlined_call_operand.vmem [shape: f32[1,32], index: 4, kind: input, shape index: {}]
  %s5 = inlined_call_operand.hbm [shape: f32[16,32], index: 5, kind: output, shape index: {}]
  %s6 = sld [smem:[#allocation0]]
  $region30: #{tpu_custom_call.1} parent=0
    _
  %s8 = ssub.s32 1, %s6
  %s9 = scalar_select 0, %s8, %s6
  $region1: #{tpu_custom_call.1} parent=0
    #allocation2 [shape = 'u8[8192]{0}', space=vmem, size = 0x2000, scoped, tag = 'output window, operand 0, single buffered']
    #allocation3 [shape = 's32[1]{0}', space=sflag, size = 0x4, scoped, tag = 'scoped memory for tpu_custom_call.1']
    %10 = vsyncpa [#allocation3], 0
    // Predicated region
    $region2: #{tpu_custom_call.1} parent=1 // pred_check
      _
    $region3: #{tpu_custom_call.1} parent=1 // pred_check_branch
      %12 = sbr.rel (0) target = $region5
    $region4: #{tpu_custom_call.1} parent=1 // pred_region
      _
    $region5: #{tpu_custom_call.1} parent=1 // pred_fallthru
      _
    // Predicated region
    $region6: #{tpu_custom_call.1} parent=1 // pred_check
      _
    $region7: #{tpu_custom_call.1} parent=1 // pred_check_branch
      %14 = sbr.rel (0) target = $region9
    $region8: #{tpu_custom_call.1} parent=1 // pred_region
      _
    $region9: #{tpu_custom_call.1} parent=1 // pred_fallthru
      _
    // Predicated region
    $region10: #{tpu_custom_call.1} parent=1 // pred_check
      _
    $region11: #{tpu_custom_call.1} parent=1 // pred_check_branch
      %16 = sbr.rel (0) target = $region13
    $region12: #{tpu_custom_call.1} parent=1 // pred_region
      _
    $region13: #{tpu_custom_call.1} parent=1 // pred_fallthru
      _
    // Predicated region
    $region14: #{tpu_custom_call.1} parent=1 // pred_check
      _
    $region15: #{tpu_custom_call.1} parent=1 // pred_check_branch
      %18 = sbr.rel (0) target = $region17
    $region16: #{tpu_custom_call.1} parent=1 // pred_region
      _
    $region17: #{tpu_custom_call.1} parent=1 // pred_fallthru
      _
    // Predicated region
    $region18: #{tpu_custom_call.1} parent=1 // pred_check
      _
    $region19: #{tpu_custom_call.1} parent=1 // pred_check_branch
      %20 = sbr.rel (0) target = $region21
    $region20: #{tpu_custom_call.1} parent=1 // pred_region
      _
    $region21: #{tpu_custom_call.1} parent=1 // pred_fallthru
      _
    %v21 = vld [vmem:[%s0] sm:$0xff]
    %v22 = vld [vmem:[%s0 + $0x8] sm:$0xff]
    %v23 = vld [vmem:[%s1] sm:$0xff]
    %v24 = vld [vmem:[%s1 + $0x8] sm:$0xff]
    %v25 = vld [vmem:[%s1 + $0x10] sm:$0xff]
    %v26 = vld [vmem:[%s1 + $0x18] sm:$0xff]
    %v27 = vld [vmem:[%s2] sm:$0x1]
    %v29 = vperm.slane %v27, 0
    %vm31 = vcmask 261120
    %v33 = vsel %vm31, %v21, 0
    %v36 = vsel %vm31, %v22, 0
    %38 = vmatpush.msra.mxu0 0.0
    %39 = vmatpush.msra.mxu0 0.0
    %40 = vmatpush.msra.mxu0 0.0
    %41 = vmatpush.msra.mxu0 0.0
    %42 = vmatpush.msra.mxu0 0.0
    %43 = vmatpush.msra.mxu0 0.0
    %44 = vmatpush.msra.mxu0 0.0
    %45 = vmatpush.msra.mxu0 0.0
    %46 = vmatpush.msra.mxu0 0.0
    %47 = vmatpush.msra.mxu0 0.0
    %48 = vmatpush.msra.mxu0 0.0
    %49 = vmatpush.msra.mxu0 0.0
    %50 = vmatpush.msra.mxu0 %v26
    %51 = vmatpush.msra.mxu0 %v25
    %52 = vmatpush.msra.mxu0 %v24
    %53 = vmatpush.msra.mxu0 %v23
    %54 = vmatmul.f32.gmra.mxu0 %v33
    %v55 = vpop.f32.mrf.mxu0
    %v56 = vadd.f32 %v29, %v55
    %57 = vmatmul.f32.gmra.mxu0 %v36
    %v58 = vpop.f32.mrf.mxu0
    %v59 = vadd.f32 %v29, %v58
    %60 = vdwg.mxu0
    %v61 = vmax.f32 %v56, 0.0
    %v62 = vmax.f32 %v59, 0.0
    %v63 = vld [vmem:[%s3] sm:$0xff]
    %v64 = vld [vmem:[%s3 + $0x8] sm:$0xff]
    %v65 = vld [vmem:[%s3 + $0x10] sm:$0xff]
    %v66 = vld [vmem:[%s3 + $0x18] sm:$0xff]
    %v67 = vld [vmem:[%s3 + $0x20] sm:$0xff]
    %v68 = vld [vmem:[%s3 + $0x28] sm:$0xff]
    %v69 = vld [vmem:[%s3 + $0x30] sm:$0xff]
    %v70 = vld [vmem:[%s3 + $0x38] sm:$0xff]
    %v71 = vld [vmem:[%s4] sm:$0x1]
    %v73 = vperm.slane %v71, 0
    %vm75 = vcmask 523264
    %v77 = vsel %vm75, %v61, 0
    %v80 = vsel %vm75, %v62, 0
    %82 = vmatpush.msra.mxu0 0.0
    %83 = vmatpush.msra.mxu0 0.0
    %84 = vmatpush.msra.mxu0 0.0
    %85 = vmatpush.msra.mxu0 0.0
    %86 = vmatpush.msra.mxu0 0.0
    %87 = vmatpush.msra.mxu0 0.0
    %88 = vmatpush.msra.mxu0 0.0
    %89 = vmatpush.msra.mxu0 0.0
    %90 = vmatpush.msra.mxu0 %v70
    %91 = vmatpush.msra.mxu0 %v69
    %92 = vmatpush.msra.mxu0 %v68
    %93 = vmatpush.msra.mxu0 %v67
    %94 = vmatpush.msra.mxu0 %v66
    %95 = vmatpush.msra.mxu0 %v65
    %96 = vmatpush.msra.mxu0 %v64
    %97 = vmatpush.msra.mxu0 %v63
    %98 = vmatmul.f32.gmra.mxu0 %v77
    %v99 = vpop.f32.mrf.mxu0
    %v100 = vadd.f32 %v73, %v99
    %101 = vmatmul.f32.gmra.mxu0 %v80
    %v102 = vpop.f32.mrf.mxu0
    %v103 = vadd.f32 %v73, %v102
    %104 = vdwg.mxu0
    %v105 = vadd.f32 %v21, %v100
    %v106 = vadd.f32 %v22, %v103
    %107 = vst.msk [vmem:[#allocation2] sm:$0xff] %vm31, %v105
    %108 = vst.msk [vmem:[#allocation2 + $0x8] sm:$0xff] %vm31, %v106
    // Predicated region
    $region22: #{tpu_custom_call.1} parent=1 // pred_check
      _
    $region23: #{tpu_custom_call.1} parent=1 // pred_check_branch
      %110 = sbr.rel (0) target = $region25
    $region24: #{tpu_custom_call.1} parent=1 // pred_region
      %112 = vsyncadd [#allocation3], 0
      %s113 = sshll.u32 [#allocation2], 4
      %s114 = int_to_ptr.vmem [resolvable:$true] %s113
      %s115 = sshll.u32 %s5, 4
      %s116 = int_to_ptr.hbm [resolvable:$true] %s115
      %121 = dma.vmem_to_hbm [thread:$0]  %s114, 256, %s116, [#allocation3], 128, 128, 8
    $region25: #{tpu_custom_call.1} parent=1 // pred_fallthru
      _
    // Predicated region
    $region26: #{tpu_custom_call.1} parent=1 // pred_check
      _
    $region27: #{tpu_custom_call.1} parent=1 // pred_check_branch
      %123 = sbr.rel (0) target = $region29
    $region28: #{tpu_custom_call.1} parent=1 // pred_region
      %125 = dma.done [#allocation3], 256
    $region29: #{tpu_custom_call.1} parent=1 // pred_fallthru
      _
    %126 = vsyncpa [#allocation3], 1

</llo_original>
